<compile_context>
chip_gen: v6e
topology: v6e:2x2x1
jax: 0.10.0
libtpu: 0.0.40
codegen_flags: <defaults>
</compile_context>

<pallas_src>
import functools

import jax
import jax.numpy as jnp
from jax import lax
from jax.experimental import pallas as pl
from jax.experimental.pallas import tpu as pltpu

DIC = {'u': 2, 'v': 3, 'w': 4, 'h': 5}


def _round_up(x, m):
    return ((x + m - 1) // m) * m


def _conv_mm_kernel(x_ref, w_ref, b_ref, o_ref, *, apply_relu):
    """One lane-dense matmul tile.

    x_ref: (K, TM)   im2col'd activations (K = 9*Cin, TM multiple of 128)
    w_ref: (Cout, K) folded conv weights (resident, constant index_map)
    b_ref: (Cout, 1) bias
    o_ref: (Cout, TM)
    """
    acc = jnp.dot(w_ref[...], x_ref[...], preferred_element_type=jnp.float32)
    acc = acc + b_ref[...].astype(jnp.float32)          # broadcast over TM
    if apply_relu:
        acc = jnp.maximum(acc, 0.0)
    o_ref[...] = acc.astype(o_ref.dtype)


def conv3x3_pallas(x_nchw, w_oihw, bias, *, apply_relu):
    """3x3 conv, stride 1, padding 1, NCHW in / NCHW out, via one Pallas matmul."""
    N, Cin, H, W = x_nchw.shape
    Cout = w_oihw.shape[0]
    K = 9 * Cin
    M = N * H * W

    # --- wrapper-side im2col (transposed: K on sublanes, pixels on lanes) ---
    xp = jnp.pad(x_nchw, ((0, 0), (0, 0), (1, 1), (1, 1)))       # (N,Cin,H+2,W+2)
    taps = [xp[:, :, dy:dy + H, dx:dx + W]                        # (N,Cin,H,W)
            for dy in range(3) for dx in range(3)]
    xcol = jnp.stack(taps, axis=2)                                # (N,Cin,9,H,W)
    xcol = xcol.transpose(1, 2, 0, 3, 4).reshape(K, M)            # (K, M)

    # --- tile / pad M (lane dim) to a multiple of 128 ---
    TM_MAX = 2048
    Mp = _round_up(M, 128)
    if Mp > TM_MAX:
        TM = TM_MAX
        Mp = _round_up(M, TM)
    else:
        TM = Mp
    if Mp != M:
        xcol = jnp.pad(xcol, ((0, 0), (0, Mp - M)))

    w_col = w_oihw.reshape(Cout, K).astype(xcol.dtype)            # (Cout, K)
    b_col = bias.reshape(Cout, 1).astype(jnp.float32)             # (Cout, 1)

    kernel = functools.partial(_conv_mm_kernel, apply_relu=apply_relu)
    out = pl.pallas_call(
        kernel,
        out_shape=jax.ShapeDtypeStruct((Cout, Mp), x_nchw.dtype),
        grid=(Mp // TM,),
        in_specs=[
            pl.BlockSpec((K, TM), lambda i: (0, i)),      # activations, lane-dense
            pl.BlockSpec((Cout, K), lambda i: (0, 0)),    # weights, resident
            pl.BlockSpec((Cout, 1), lambda i: (0, 0)),    # bias, resident
        ],
        out_specs=pl.BlockSpec((Cout, TM), lambda i: (0, i)),      # lane-dense
        compiler_params=pltpu.CompilerParams(
            dimension_semantics=("parallel",)),           # independent M tiles
    )(xcol, w_col, b_col)

    out = out[:, :M].reshape(Cout, N, H, W).transpose(1, 0, 2, 3)  # -> NCHW
    return out


def dconv_forward(x, weights_oihw, biases, connection):
    """Pallas-backed DConv.forward.  x: (b, c, u, v, w, h)."""
    assert len(connection) == 2, 'The number of dimensions convolved should be 2.'
    b, c = x.shape[0], x.shape[1]
    sz = list(x.shape)
    dims_1 = [DIC[i] for i in connection]
    dims_0 = [DIC[i] for i in DIC if i not in connection]
    dims_map = (0, *dims_0, 1, *dims_1)

    xt = jnp.transpose(x, dims_map)
    N = b * sz[dims_0[0]] * sz[dims_0[1]]
    Hc, Wc = sz[dims_1[0]], sz[dims_1[1]]
    xt = xt.reshape(N, c, Hc, Wc)                 # NCHW batch of sub-images

    n_layers = len(weights_oihw)
    for i in range(n_layers):
        # ReLU only after the whole conv stack (matches nn.Sequential + act).
        xt = conv3x3_pallas(xt, weights_oihw[i], biases[i],
                            apply_relu=(i == n_layers - 1))

    Cout = xt.shape[1]
    y = xt.reshape(b, sz[dims_0[0]], sz[dims_0[1]], Cout, Hc, Wc)
    inv = [0] * 6
    for pos, ax in enumerate(dims_map):
        inv[ax] = pos
    return jnp.transpose(y, inv)


def dconv_reference(x, weights_oihw, biases, connection):
    """Pure-JAX reference mirroring the PyTorch forward (for verification)."""
    b, c = x.shape[0], x.shape[1]
    sz = list(x.shape)
    dims_1 = [DIC[i] for i in connection]
    dims_0 = [DIC[i] for i in DIC if i not in connection]
    dims_map = (0, *dims_0, 1, *dims_1)
    xt = jnp.transpose(x, dims_map).reshape(
        b * sz[dims_0[0]] * sz[dims_0[1]], c, sz[dims_1[0]], sz[dims_1[1]])
    for w, bi in zip(weights_oihw, biases):
        xt = lax.conv_general_dilated(
            xt, w, window_strides=(1, 1), padding=((1, 1), (1, 1)),
            dimension_numbers=('NCHW', 'OIHW', 'NCHW')) + bi[None, :, None, None]
    xt = jnp.maximum(xt, 0.0)
    Cout = xt.shape[1]
    y = xt.reshape(b, sz[dims_0[0]], sz[dims_0[1]], Cout,
                   sz[dims_1[0]], sz[dims_1[1]])
    inv = [0] * 6
    for pos, ax in enumerate(dims_map):
        inv[ax] = pos
    return jnp.transpose(y, inv)


if __name__ == "__main__":
    key = jax.random.PRNGKey(0)
    kx, kw, kb = jax.random.split(key, 3)

    in_channels, out_channels = 4, 8
    connection = 'wh'            # convolve over the (w, h) dims
    n_layers = 1

    # x: (b, c, u, v, w, h) = (2, 4, 3, 3, 8, 8)
    x = jax.random.normal(kx, (2, in_channels, 3, 3, 8, 8), jnp.float32)
    # deterministic synthetic Conv2d params (PyTorch OIHW layout)
    weights = [jax.random.normal(kw, (out_channels, in_channels, 3, 3),
                                 jnp.float32) * 0.1]
    biases = [jax.random.normal(kb, (out_channels,), jnp.float32) * 0.1]

    out = dconv_forward(x, weights, biases, connection)
    out = jax.block_until_ready(out)

    ref = dconv_reference(x, weights, biases, connection)
    assert out.shape == (2, out_channels, 3, 3, 8, 8), out.shape
    assert jnp.allclose(out, ref, atol=1e-4, rtol=1e-4), \
        float(jnp.max(jnp.abs(out - ref)))

    print("KERNEL_OK")
</pallas_src>

<mosaic_0001>
module attributes {stable_mosaic.version = 11 : i64} {
  func.func @_conv_mm_kernel(%arg0: i32, %arg1: memref<36x1152xf32, #tpu.memory_space<vmem>>, %arg2: memref<8x36xf32, #tpu.memory_space<vmem>>, %arg3: memref<8x1xf32, #tpu.memory_space<vmem>>, %arg4: memref<8x1152xf32, #tpu.memory_space<vmem>>) attributes {dimension_semantics = [#tpu.dimension_semantics<parallel>], iteration_bounds = array<i64: 1>, scalar_prefetch = 0 : i64, scratch_operands = 0 : i64, tpu.core_type = #tpu.core_type<tc>, window_params = [{transform_indices = @transform_0, window_bounds = array<i64: 36, 1152>}, {pipeline_mode = #tpu.pipeline_mode<synchronous>, transform_indices = @transform_1, window_bounds = array<i64: 8, 36>}, {pipeline_mode = #tpu.pipeline_mode<synchronous>, transform_indices = @transform_2, window_bounds = array<i64: 8, 1>}, {transform_indices = @transform_3, window_bounds = array<i64: 8, 1152>}]} {
    %c0 = arith.constant 0 : index
    %c0_0 = arith.constant 0 : index
    %0 = vector.load %arg2[%c0, %c0_0] : memref<8x36xf32, #tpu.memory_space<vmem>>, vector<8x36xf32>
    %c0_1 = arith.constant 0 : index
    %c0_2 = arith.constant 0 : index
    %1 = vector.load %arg1[%c0_1, %c0_2] : memref<36x1152xf32, #tpu.memory_space<vmem>>, vector<36x1152xf32>
    %cst = arith.constant dense<0.000000e+00> : vector<8x1152xf32>
    %2 = tpu.matmul %0, %1, %cst {dimension_numbers = #tpu.dot_dimension_numbers<[1], [0], [0], [1], [0, 0, 1, 1], [], []>} : vector<8x36xf32>, vector<36x1152xf32>, vector<8x1152xf32> -> vector<8x1152xf32>
    %c0_3 = arith.constant 0 : index
    %c0_4 = arith.constant 0 : index
    %3 = vector.load %arg3[%c0_3, %c0_4] : memref<8x1xf32, #tpu.memory_space<vmem>>, vector<8x1xf32>
    %4 = vector.broadcast %3 : vector<8x1xf32> to vector<8x1152xf32>
    %5 = arith.addf %2, %4 : vector<8x1152xf32>
    %cst_5 = arith.constant 0.000000e+00 : f32
    %6 = vector.broadcast %cst_5 : f32 to vector<8x1152xf32>
    %7 = arith.maximumf %5, %6 : vector<8x1152xf32>
    %c0_6 = arith.constant 0 : index
    %c0_7 = arith.constant 0 : index
    %8 = vector.load %arg4[%c0_6, %c0_7] : memref<8x1152xf32, #tpu.memory_space<vmem>>, vector<8x1152xf32>
    tpu.vector_store %arg4[%c0_6, %c0_7], %7 {strides = array<i32>} : memref<8x1152xf32, #tpu.memory_space<vmem>>, vector<8x1152xf32>,
    return
  }
  func.func @transform_0(%arg0: i32) -> (i32, i32) {
    %c0_i32 = arith.constant 0 : i32
    %c0_i32_0 = arith.constant 0 : i32
    return %c0_i32, %arg0 : i32, i32
  }
  func.func @transform_1(%arg0: i32) -> (i32, i32) {
    %c0_i32 = arith.constant 0 : i32
    %c0_i32_0 = arith.constant 0 : i32
    %c0_i32_1 = arith.constant 0 : i32
    return %c0_i32, %c0_i32_0 : i32, i32
  }
  func.func @transform_2(%arg0: i32) -> (i32, i32) {
    %c0_i32 = arith.constant 0 : i32
    %c0_i32_0 = arith.constant 0 : i32
    %c0_i32_1 = arith.constant 0 : i32
    return %c0_i32, %c0_i32_0 : i32, i32
  }
  func.func @transform_3(%arg0: i32) -> (i32, i32) {
    %c0_i32 = arith.constant 0 : i32
    %c0_i32_0 = arith.constant 0 : i32
    return %c0_i32, %arg0 : i32, i32
  }
}

</mosaic_0001>

<llo_original>
// kernel: tpu_custom_call.1
$region0: #{tpu_custom_call.1}
  #allocation0 [shape = 'u32[]', space=smem, size = 0x4, offset = 0x4, fixed_abs, tag = 'smem constant byte address 0x4 - core index']
  #allocation1 [shape = 'u32[144,128]{1,0:T(1,128)}', space=vmem, size = 0x12000, scoped, tag = 'internal scratch']
  %s0 = inlined_call_operand.hbm [shape: f32[36,1152], index: 0, kind: input, shape index: {}]
  %s1 = inlined_call_operand.vmem [shape: f32[8,36], index: 1, kind: input, shape index: {}]
  %s2 = inlined_call_operand.vmem [shape: f32[8,1], index: 2, kind: input, shape index: {}]
  %s3 = inlined_call_operand.hbm [shape: f32[8,1152], index: 3, kind: output, shape index: {}]
  %s4 = sld [smem:[#allocation0]]
  $region26: #{tpu_custom_call.1} parent=0
    _
  %s6 = ssub.s32 1, %s4
  %s7 = scalar_select 0, %s6, %s4
  $region1: #{tpu_custom_call.1} parent=0
    #allocation2 [shape = 'u8[184320]{0}', space=vmem, size = 0x2d000, scoped, tag = 'input window, operand 0, single buffered']
    #allocation3 [shape = 's32[1]{0}', space=sflag, size = 0x4, scoped, tag = 'scoped memory for tpu_custom_call.1']
    #allocation4 [shape = 's32[1]{0}', space=sflag, size = 0x4, scoped, tag = 'scoped memory for tpu_custom_call.1']
    #allocation5 [shape = 'u8[36864]{0}', space=vmem, size = 0x9000, scoped, tag = 'output window, operand 0, single buffered']
    %8 = vsyncpa [#allocation3], 0
    %9 = vsyncpa [#allocation4], 0
    // Predicated region
    $region2: #{tpu_custom_call.1} parent=1 // pred_check
      _
    $region3: #{tpu_custom_call.1} parent=1 // pred_check_branch
      %11 = sbr.rel (0) target = $region5
    $region4: #{tpu_custom_call.1} parent=1 // pred_region
      %s13 = ssub.s32 5760, 5760
      %14 = vsyncadd [#allocation3], %s13
      %s15 = sshll.u32 [#allocation2], 4
      %s16 = int_to_ptr.vmem [resolvable:$true] %s15
      %21 = dma.hbm_to_vmem [thread:$0]  %s0, 5760, %s16, [#allocation3], 1152, 1152, 72
    $region5: #{tpu_custom_call.1} parent=1 // pred_fallthru
      _
    // Predicated region
    $region6: #{tpu_custom_call.1} parent=1 // pred_check
      _
    $region7: #{tpu_custom_call.1} parent=1 // pred_check_branch
      %23 = sbr.rel (0) target = $region9
    $region8: #{tpu_custom_call.1} parent=1 // pred_region
      _
    $region9: #{tpu_custom_call.1} parent=1 // pred_fallthru
      _
    // Predicated region
    $region10: #{tpu_custom_call.1} parent=1 // pred_check
      _
    $region11: #{tpu_custom_call.1} parent=1 // pred_check_branch
      %25 = sbr.rel (0) target = $region13
    $region12: #{tpu_custom_call.1} parent=1 // pred_region
      _
    $region13: #{tpu_custom_call.1} parent=1 // pred_fallthru
      _
    // Predicated region
    $region14: #{tpu_custom_call.1} parent=1 // pred_check
      _
    $region15: #{tpu_custom_call.1} parent=1 // pred_check_branch
      %27 = sbr.rel (0) target = $region17
    $region16: #{tpu_custom_call.1} parent=1 // pred_region
      %28 = dma.done [#allocation3], 5760
    $region17: #{tpu_custom_call.1} parent=1 // pred_fallthru
      _
    %v29 = vld [vmem:[%s1] sm:$0xff]
    %v30 = vld [vmem:[#allocation2] sm:$0xff]
    %v31 = vld [vmem:[#allocation2 + $0x8] sm:$0xff]
    %v32 = vld [vmem:[#allocation2 + $0x10] sm:$0xff]
    %v33 = vld [vmem:[#allocation2 + $0x18] sm:$0xff]
    %v34 = vld [vmem:[#allocation2 + $0x20] sm:$0xff]
    %v35 = vld [vmem:[#allocation2 + $0x28] sm:$0xff]
    %v36 = vld [vmem:[#allocation2 + $0x30] sm:$0xff]
    %v37 = vld [vmem:[#allocation2 + $0x38] sm:$0xff]
    %v38 = vld [vmem:[#allocation2 + $0x40] sm:$0xff]
    %v39 = vld [vmem:[#allocation2 + $0x48] sm:$0xff]
    %v40 = vld [vmem:[#allocation2 + $0x50] sm:$0xff]
    %v41 = vld [vmem:[#allocation2 + $0x58] sm:$0xff]
    %v42 = vld [vmem:[#allocation2 + $0x60] sm:$0xff]
    %v43 = vld [vmem:[#allocation2 + $0x68] sm:$0xff]
    %v44 = vld [vmem:[#allocation2 + $0x70] sm:$0xff]
    %v45 = vld [vmem:[#allocation2 + $0x78] sm:$0xff]
    %v46 = vld [vmem:[#allocation2 + $0x80] sm:$0xff]
    %v47 = vld [vmem:[#allocation2 + $0x88] sm:$0xff]
    %v48 = vld [vmem:[#allocation2 + $0x90] sm:$0xff]
    %v49 = vld [vmem:[#allocation2 + $0x98] sm:$0xff]
    %v50 = vld [vmem:[#allocation2 + $0xa0] sm:$0xff]
    %v51 = vld [vmem:[#allocation2 + $0xa8] sm:$0xff]
    %v52 = vld [vmem:[#allocation2 + $0xb0] sm:$0xff]
    %v53 = vld [vmem:[#allocation2 + $0xb8] sm:$0xff]
    %v54 = vld [vmem:[#allocation2 + $0xc0] sm:$0xff]
    %v55 = vld [vmem:[#allocation2 + $0xc8] sm:$0xff]
    %v56 = vld [vmem:[#allocation2 + $0xd0] sm:$0xff]
    %v57 = vld [vmem:[#allocation2 + $0xd8] sm:$0xff]
    %v58 = vld [vmem:[#allocation2 + $0xe0] sm:$0xff]
    %v59 = vld [vmem:[#allocation2 + $0xe8] sm:$0xff]
    %v60 = vld [vmem:[#allocation2 + $0xf0] sm:$0xff]
    %v61 = vld [vmem:[#allocation2 + $0xf8] sm:$0xff]
    %v62 = vld [vmem:[#allocation2 + $0x100] sm:$0xff]
    %v63 = vld [vmem:[#allocation2 + $0x108] sm:$0xff]
    %v64 = vld [vmem:[#allocation2 + $0x110] sm:$0xff]
    %v65 = vld [vmem:[#allocation2 + $0x118] sm:$0xff]
    %v66 = vld [vmem:[#allocation2 + $0x120] sm:$0xf]
    %v67 = vld [vmem:[#allocation2 + $0x128] sm:$0xf]
    %v68 = vld [vmem:[#allocation2 + $0x130] sm:$0xf]
    %v69 = vld [vmem:[#allocation2 + $0x138] sm:$0xf]
    %v70 = vld [vmem:[#allocation2 + $0x140] sm:$0xf]
    %v71 = vld [vmem:[#allocation2 + $0x148] sm:$0xf]
    %v72 = vld [vmem:[#allocation2 + $0x150] sm:$0xf]
    %v73 = vld [vmem:[#allocation2 + $0x158] sm:$0xf]
    %v74 = vld [vmem:[#allocation2 + $0x160] sm:$0xf]
    %v75 = vld [vmem:[%s2] sm:$0xff]
    %77 = vset.pattern.permute.xlu0 0
    %78 = vperm.xlu0 %77, %v75
    %v79 = vpop.permute.xlu0 %78
    %vm81 = vcmask 293888
    %v83 = vsel %vm81, %v29, 0
    %vm85 = vcmask 1043456
    %v87 = vsel %vm85, %v66, 0
    %v90 = vsel %vm85, %v67, 0
    %v93 = vsel %vm85, %v68, 0
    %v96 = vsel %vm85, %v69, 0
    %v99 = vsel %vm85, %v70, 0
    %v102 = vsel %vm85, %v71, 0
    %v105 = vsel %vm85, %v72, 0
    %v108 = vsel %vm85, %v73, 0
    %v111 = vsel %vm85, %v74, 0
    %113 = vmatprep.subr.mxu0 0.0
    %114 = vmatpush1.msra.mxu0 0.0
    %115 = vmatprep.subr.mxu0 0.0
    %116 = vmatpush1.msra.mxu0 0.0
    %117 = vmatprep.subr.mxu0 0.0
    %118 = vmatpush1.msra.mxu0 0.0
    %119 = vmatprep.subr.mxu0 0.0
    %120 = vmatpush1.msra.mxu0 0.0
    %121 = vmatprep.subr.mxu0 0.0
    %122 = vmatpush1.msra.mxu0 0.0
    %123 = vmatprep.subr.mxu0 0.0
    %124 = vmatpush1.msra.mxu0 0.0
    %125 = vmatprep.subr.mxu0 0.0
    %126 = vmatpush1.msra.mxu0 0.0
    %127 = vmatprep.subr.mxu0 0.0
    %128 = vmatpush1.msra.mxu0 0.0
    %129 = vmatprep.subr.mxu0 0.0
    %130 = vmatpush1.msra.mxu0 0.0
    %131 = vmatprep.subr.mxu0 0.0
    %132 = vmatpush1.msra.mxu0 0.0
    %133 = vmatprep.subr.mxu0 0.0
    %134 = vmatpush1.msra.mxu0 0.0
    %135 = vmatprep.subr.mxu0 %v90
    %136 = vmatpush1.msra.mxu0 %v87
    %137 = vmatprep.subr.mxu0 %v58
    %138 = vmatpush1.msra.mxu0 %v57
    %139 = vmatprep.subr.mxu0 %v49
    %140 = vmatpush1.msra.mxu0 %v48
    %141 = vmatprep.subr.mxu0 %v40
    %142 = vmatpush1.msra.mxu0 %v39
    %143 = vmatprep.subr.mxu0 %v31
    %144 = vmatpush1.msra.mxu0 %v30
    %145 = vmatprep.subr.mxu0 0.0
    %146 = vmatpush2.msra.mxu0 0.0
    %147 = vmatprep.subr.mxu0 0.0
    %148 = vmatpush2.msra.mxu0 0.0
    %149 = vmatprep.subr.mxu0 0.0
    %150 = vmatpush2.msra.mxu0 0.0
    %151 = vmatprep.subr.mxu0 0.0
    %152 = vmatpush2.msra.mxu0 0.0
    %153 = vmatprep.subr.mxu0 0.0
    %154 = vmatpush2.msra.mxu0 0.0
    %155 = vmatprep.subr.mxu0 0.0
    %156 = vmatpush2.msra.mxu0 0.0
    %157 = vmatprep.subr.mxu0 0.0
    %158 = vmatpush2.msra.mxu0 0.0
    %159 = vmatprep.subr.mxu0 0.0
    %160 = vmatpush2.msra.mxu0 0.0
    %161 = vmatprep.subr.mxu0 0.0
    %162 = vmatpush2.msra.mxu0 0.0
    %163 = vmatprep.subr.mxu0 0.0
    %164 = vmatpush2.msra.mxu0 0.0
    %165 = vmatprep.subr.mxu0 0.0
    %166 = vmatpush2.msra.mxu0 0.0
    %167 = vmatprep.subr.mxu0 0.0
    %168 = vmatpush2.msra.mxu0 0.0
    %169 = vmatprep.subr.mxu0 0.0
    %170 = vmatpush2.msra.mxu0 0.0
    %171 = vmatprep.subr.mxu0 0.0
    %172 = vmatpush2.msra.mxu0 0.0
    %173 = vmatprep.subr.mxu0 0.0
    %174 = vmatpush2.msra.mxu0 0.0
    %175 = vmatprep.subr.mxu0 0.0
    %176 = vmatpush2.msra.mxu0 0.0
    %177 = vmatprep.mubr.f32.mxu0 0.0
    %178 = vmatmul.mubr.f32.gmra.mxu0 %v83
    %v179 = vpop.f32.mrf.mxu0
    %v180 = vadd.f32 %v79, %v179
    %v181 = vpop.f32.mrf.mxu0
    %v182 = vadd.f32 %v79, %v181
    %183 = vdwg.mxu0
    %184 = vmatprep.subr.mxu0 0.0
    %185 = vmatpush1.msra.mxu0 0.0
    %186 = vmatprep.subr.mxu0 0.0
    %187 = vmatpush1.msra.mxu0 0.0
    %188 = vmatprep.subr.mxu0 0.0
    %189 = vmatpush1.msra.mxu0 0.0
    %190 = vmatprep.subr.mxu0 0.0
    %191 = vmatpush1.msra.mxu0 0.0
    %192 = vmatprep.subr.mxu0 0.0
    %193 = vmatpush1.msra.mxu0 0.0
    %194 = vmatprep.subr.mxu0 0.0
    %195 = vmatpush1.msra.mxu0 0.0
    %196 = vmatprep.subr.mxu0 0.0
    %197 = vmatpush1.msra.mxu0 0.0
    %198 = vmatprep.subr.mxu0 0.0
    %199 = vmatpush1.msra.mxu0 0.0
    %200 = vmatprep.subr.mxu0 0.0
    %201 = vmatpush1.msra.mxu0 0.0
    %202 = vmatprep.subr.mxu0 0.0
    %203 = vmatpush1.msra.mxu0 0.0
    %204 = vmatprep.subr.mxu0 0.0
    %205 = vmatpush1.msra.mxu0 0.0
    %206 = vmatprep.subr.mxu0 %v96
    %207 = vmatpush1.msra.mxu0 %v93
    %208 = vmatprep.subr.mxu0 %v60
    %209 = vmatpush1.msra.mxu0 %v59
    %210 = vmatprep.subr.mxu0 %v51
    %211 = vmatpush1.msra.mxu0 %v50
    %212 = vmatprep.subr.mxu0 %v42
    %213 = vmatpush1.msra.mxu0 %v41
    %214 = vmatprep.subr.mxu0 %v33
    %215 = vmatpush1.msra.mxu0 %v32
    %216 = vmatprep.subr.mxu0 0.0
    %217 = vmatpush2.msra.mxu0 0.0
    %218 = vmatprep.subr.mxu0 0.0
    %219 = vmatpush2.msra.mxu0 0.0
    %220 = vmatprep.subr.mxu0 0.0
    %221 = vmatpush2.msra.mxu0 0.0
    %222 = vmatprep.subr.mxu0 0.0
    %223 = vmatpush2.msra.mxu0 0.0
    %224 = vmatprep.subr.mxu0 0.0
    %225 = vmatpush2.msra.mxu0 0.0
    %226 = vmatprep.subr.mxu0 0.0
    %227 = vmatpush2.msra.mxu0 0.0
    %228 = vmatprep.subr.mxu0 0.0
    %229 = vmatpush2.msra.mxu0 0.0
    %230 = vmatprep.subr.mxu0 0.0
    %231 = vmatpush2.msra.mxu0 0.0
    %232 = vmatprep.subr.mxu0 0.0
    %233 = vmatpush2.msra.mxu0 0.0
    %234 = vmatprep.subr.mxu0 0.0
    %235 = vmatpush2.msra.mxu0 0.0
    %236 = vmatprep.subr.mxu0 0.0
    %237 = vmatpush2.msra.mxu0 0.0
    %238 = vmatprep.subr.mxu0 0.0
    %239 = vmatpush2.msra.mxu0 0.0
    %240 = vmatprep.subr.mxu0 0.0
    %241 = vmatpush2.msra.mxu0 0.0
    %242 = vmatprep.subr.mxu0 0.0
    %243 = vmatpush2.msra.mxu0 0.0
    %244 = vmatprep.subr.mxu0 0.0
    %245 = vmatpush2.msra.mxu0 0.0
    %246 = vmatprep.subr.mxu0 0.0
    %247 = vmatpush2.msra.mxu0 0.0
    %248 = vmatprep.mubr.f32.mxu0 0.0
    %249 = vmatmul.mubr.f32.gmra.mxu0 %v83
    %v250 = vpop.f32.mrf.mxu0
    %v251 = vadd.f32 %v79, %v250
    %v252 = vpop.f32.mrf.mxu0
    %v253 = vadd.f32 %v79, %v252
    %254 = vdwg.mxu0
    %255 = vmatprep.subr.mxu0 0.0
    %256 = vmatpush1.msra.mxu0 0.0
    %257 = vmatprep.subr.mxu0 0.0
    %258 = vmatpush1.msra.mxu0 0.0
    %259 = vmatprep.subr.mxu0 0.0
    %260 = vmatpush1.msra.mxu0 0.0
    %261 = vmatprep.subr.mxu0 0.0
    %262 = vmatpush1.msra.mxu0 0.0
    %263 = vmatprep.subr.mxu0 0.0
    %264 = vmatpush1.msra.mxu0 0.0
    %265 = vmatprep.subr.mxu0 0.0
    %266 = vmatpush1.msra.mxu0 0.0
    %267 = vmatprep.subr.mxu0 0.0
    %268 = vmatpush1.msra.mxu0 0.0
    %269 = vmatprep.subr.mxu0 0.0
    %270 = vmatpush1.msra.mxu0 0.0
    %271 = vmatprep.subr.mxu0 0.0
    %272 = vmatpush1.msra.mxu0 0.0
    %273 = vmatprep.subr.mxu0 0.0
    %274 = vmatpush1.msra.mxu0 0.0
    %275 = vmatprep.subr.mxu0 0.0
    %276 = vmatpush1.msra.mxu0 0.0
    %277 = vmatprep.subr.mxu0 %v102
    %278 = vmatpush1.msra.mxu0 %v99
    %279 = vmatprep.subr.mxu0 %v62
    %280 = vmatpush1.msra.mxu0 %v61
    %281 = vmatprep.subr.mxu0 %v53
    %282 = vmatpush1.msra.mxu0 %v52
    %283 = vmatprep.subr.mxu0 %v44
    %284 = vmatpush1.msra.mxu0 %v43
    %285 = vmatprep.subr.mxu0 %v35
    %286 = vmatpush1.msra.mxu0 %v34
    %287 = vmatprep.subr.mxu0 0.0
    %288 = vmatpush2.msra.mxu0 0.0
    %289 = vmatprep.subr.mxu0 0.0
    %290 = vmatpush2.msra.mxu0 0.0
    %291 = vmatprep.subr.mxu0 0.0
    %292 = vmatpush2.msra.mxu0 0.0
    %293 = vmatprep.subr.mxu0 0.0
    %294 = vmatpush2.msra.mxu0 0.0
    %295 = vmatprep.subr.mxu0 0.0
    %296 = vmatpush2.msra.mxu0 0.0
    %297 = vmatprep.subr.mxu0 0.0
    %298 = vmatpush2.msra.mxu0 0.0
    %299 = vmatprep.subr.mxu0 0.0
    %300 = vmatpush2.msra.mxu0 0.0
    %301 = vmatprep.subr.mxu0 0.0
    %302 = vmatpush2.msra.mxu0 0.0
    %303 = vmatprep.subr.mxu0 0.0
    %304 = vmatpush2.msra.mxu0 0.0
    %305 = vmatprep.subr.mxu0 0.0
    %306 = vmatpush2.msra.mxu0 0.0
    %307 = vmatprep.subr.mxu0 0.0
    %308 = vmatpush2.msra.mxu0 0.0
    %309 = vmatprep.subr.mxu0 0.0
    %310 = vmatpush2.msra.mxu0 0.0
    %311 = vmatprep.subr.mxu0 0.0
    %312 = vmatpush2.msra.mxu0 0.0
    %313 = vmatprep.subr.mxu0 0.0
    %314 = vmatpush2.msra.mxu0 0.0
    %315 = vmatprep.subr.mxu0 0.0
    %316 = vmatpush2.msra.mxu0 0.0
    %317 = vmatprep.subr.mxu0 0.0
    %318 = vmatpush2.msra.mxu0 0.0
    %319 = vmatprep.mubr.f32.mxu0 0.0
    %320 = vmatmul.mubr.f32.gmra.mxu0 %v83
    %v321 = vpop.f32.mrf.mxu0
    %v322 = vadd.f32 %v79, %v321
    %v323 = vpop.f32.mrf.mxu0
    %v324 = vadd.f32 %v79, %v323
    %325 = vdwg.mxu0
    %326 = vmatprep.subr.mxu0 0.0
    %327 = vmatpush1.msra.mxu0 0.0
    %328 = vmatprep.subr.mxu0 0.0
    %329 = vmatpush1.msra.mxu0 0.0
    %330 = vmatprep.subr.mxu0 0.0
    %331 = vmatpush1.msra.mxu0 0.0
    %332 = vmatprep.subr.mxu0 0.0
    %333 = vmatpush1.msra.mxu0 0.0
    %334 = vmatprep.subr.mxu0 0.0
    %335 = vmatpush1.msra.mxu0 0.0
    %336 = vmatprep.subr.mxu0 0.0
    %337 = vmatpush1.msra.mxu0 0.0
    %338 = vmatprep.subr.mxu0 0.0
    %339 = vmatpush1.msra.mxu0 0.0
    %340 = vmatprep.subr.mxu0 0.0
    %341 = vmatpush1.msra.mxu0 0.0
    %342 = vmatprep.subr.mxu0 0.0
    %343 = vmatpush1.msra.mxu0 0.0
    %344 = vmatprep.subr.mxu0 0.0
    %345 = vmatpush1.msra.mxu0 0.0
    %346 = vmatprep.subr.mxu0 0.0
    %347 = vmatpush1.msra.mxu0 0.0
    %348 = vmatprep.subr.mxu0 %v108
    %349 = vmatpush1.msra.mxu0 %v105
    %350 = vmatprep.subr.mxu0 %v64
    %351 = vmatpush1.msra.mxu0 %v63
    %352 = vmatprep.subr.mxu0 %v55
    %353 = vmatpush1.msra.mxu0 %v54
    %354 = vmatprep.subr.mxu0 %v46
    %355 = vmatpush1.msra.mxu0 %v45
    %356 = vmatprep.subr.mxu0 %v37
    %357 = vmatpush1.msra.mxu0 %v36
    %358 = vmatprep.subr.mxu0 0.0
    %359 = vmatpush2.msra.mxu0 0.0
    %360 = vmatprep.subr.mxu0 0.0
    %361 = vmatpush2.msra.mxu0 0.0
    %362 = vmatprep.subr.mxu0 0.0
    %363 = vmatpush2.msra.mxu0 0.0
    %364 = vmatprep.subr.mxu0 0.0
    %365 = vmatpush2.msra.mxu0 0.0
    %366 = vmatprep.subr.mxu0 0.0
    %367 = vmatpush2.msra.mxu0 0.0
    %368 = vmatprep.subr.mxu0 0.0
    %369 = vmatpush2.msra.mxu0 0.0
    %370 = vmatprep.subr.mxu0 0.0
    %371 = vmatpush2.msra.mxu0 0.0
    %372 = vmatprep.subr.mxu0 0.0
    %373 = vmatpush2.msra.mxu0 0.0
    %374 = vmatprep.subr.mxu0 0.0
    %375 = vmatpush2.msra.mxu0 0.0
    %376 = vmatprep.subr.mxu0 0.0
    %377 = vmatpush2.msra.mxu0 0.0
    %378 = vmatprep.subr.mxu0 0.0
    %379 = vmatpush2.msra.mxu0 0.0
    %380 = vmatprep.subr.mxu0 0.0
    %381 = vmatpush2.msra.mxu0 0.0
    %382 = vmatprep.subr.mxu0 0.0
    %383 = vmatpush2.msra.mxu0 0.0
    %384 = vmatprep.subr.mxu0 0.0
    %385 = vmatpush2.msra.mxu0 0.0
    %386 = vmatprep.subr.mxu0 0.0
    %387 = vmatpush2.msra.mxu0 0.0
    %388 = vmatprep.subr.mxu0 0.0
    %389 = vmatpush2.msra.mxu0 0.0
    %390 = vmatprep.mubr.f32.mxu0 0.0
    %391 = vmatmul.mubr.f32.gmra.mxu0 %v83
    %v392 = vpop.f32.mrf.mxu0
    %v393 = vadd.f32 %v79, %v392
    %v394 = vpop.f32.mrf.mxu0
    %v395 = vadd.f32 %v79, %v394
    %396 = vdwg.mxu0
    %397 = vmatprep.subr.mxu0 0.0
    %398 = vmatpush1.msra.mxu0 0.0
    %399 = vmatprep.subr.mxu0 0.0
    %400 = vmatpush1.msra.mxu0 0.0
    %401 = vmatprep.subr.mxu0 0.0
    %402 = vmatpush1.msra.mxu0 0.0
    %403 = vmatprep.subr.mxu0 0.0
    %404 = vmatpush1.msra.mxu0 0.0
    %405 = vmatprep.subr.mxu0 0.0
    %406 = vmatpush1.msra.mxu0 0.0
    %407 = vmatprep.subr.mxu0 0.0
    %408 = vmatpush1.msra.mxu0 0.0
    %409 = vmatprep.subr.mxu0 0.0
    %410 = vmatpush1.msra.mxu0 0.0
    %411 = vmatprep.subr.mxu0 0.0
    %412 = vmatpush1.msra.mxu0 0.0
    %413 = vmatprep.subr.mxu0 0.0
    %414 = vmatpush1.msra.mxu0 0.0
    %415 = vmatprep.subr.mxu0 0.0
    %416 = vmatpush1.msra.mxu0 0.0
    %417 = vmatprep.subr.mxu0 0.0
    %418 = vmatpush1.msra.mxu0 0.0
    %419 = vmatprep.subr.mxu0 0.0
    %420 = vmatpush1.msra.mxu0 %v111
    %421 = vmatprep.subr.mxu0 0.0
    %422 = vmatpush1.msra.mxu0 %v65
    %423 = vmatprep.subr.mxu0 0.0
    %424 = vmatpush1.msra.mxu0 %v56
    %425 = vmatprep.subr.mxu0 0.0
    %426 = vmatpush1.msra.mxu0 %v47
    %427 = vmatprep.subr.mxu0 0.0
    %428 = vmatpush1.msra.mxu0 %v38
    %429 = vmatprep.subr.mxu0 0.0
    %430 = vmatpush2.msra.mxu0 0.0
    %431 = vmatprep.subr.mxu0 0.0
    %432 = vmatpush2.msra.mxu0 0.0
    %433 = vmatprep.subr.mxu0 0.0
    %434 = vmatpush2.msra.mxu0 0.0
    %435 = vmatprep.subr.mxu0 0.0
    %436 = vmatpush2.msra.mxu0 0.0
    %437 = vmatprep.subr.mxu0 0.0
    %438 = vmatpush2.msra.mxu0 0.0
    %439 = vmatprep.subr.mxu0 0.0
    %440 = vmatpush2.msra.mxu0 0.0
    %441 = vmatprep.subr.mxu0 0.0
    %442 = vmatpush2.msra.mxu0 0.0
    %443 = vmatprep.subr.mxu0 0.0
    %444 = vmatpush2.msra.mxu0 0.0
    %445 = vmatprep.subr.mxu0 0.0
    %446 = vmatpush2.msra.mxu0 0.0
    %447 = vmatprep.subr.mxu0 0.0
    %448 = vmatpush2.msra.mxu0 0.0
    %449 = vmatprep.subr.mxu0 0.0
    %450 = vmatpush2.msra.mxu0 0.0
    %451 = vmatprep.subr.mxu0 0.0
    %452 = vmatpush2.msra.mxu0 0.0
    %453 = vmatprep.subr.mxu0 0.0
    %454 = vmatpush2.msra.mxu0 0.0
    %455 = vmatprep.subr.mxu0 0.0
    %456 = vmatpush2.msra.mxu0 0.0
    %457 = vmatprep.subr.mxu0 0.0
    %458 = vmatpush2.msra.mxu0 0.0
    %459 = vmatprep.subr.mxu0 0.0
    %460 = vmatpush2.msra.mxu0 0.0
    %461 = vmatprep.mubr.f32.mxu0 0.0
    %462 = vmatmul.mubr.f32.gmra.mxu0 %v83
    %v463 = vpop.f32.mrf.mxu0
    %v464 = vadd.f32 %v79, %v463
    %v465 = vpop.f32.mrf.mxu0
    %466 = vdwg.mxu0
    %v467 = vmax.f32 %v180, 0.0
    %v468 = vmax.f32 %v182, 0.0
    %v469 = vmax.f32 %v251, 0.0
    %v470 = vmax.f32 %v253, 0.0
    %v471 = vmax.f32 %v322, 0.0
    %v472 = vmax.f32 %v324, 0.0
    %v473 = vmax.f32 %v393, 0.0
    %v474 = vmax.f32 %v395, 0.0
    %v475 = vmax.f32 %v464, 0.0
    %476 = vst [vmem:[#allocation5] sm:$0xff] %v467
    %477 = vst [vmem:[#allocation5 + $0x8] sm:$0xff] %v468
    %478 = vst [vmem:[#allocation5 + $0x10] sm:$0xff] %v469
    %479 = vst [vmem:[#allocation5 + $0x18] sm:$0xff] %v470
    %480 = vst [vmem:[#allocation5 + $0x20] sm:$0xff] %v471
    %481 = vst [vmem:[#allocation5 + $0x28] sm:$0xff] %v472
    %482 = vst [vmem:[#allocation5 + $0x30] sm:$0xff] %v473
    %483 = vst [vmem:[#allocation5 + $0x38] sm:$0xff] %v474
    %484 = vst [vmem:[#allocation5 + $0x40] sm:$0xff] %v475
    // Predicated region
    $region18: #{tpu_custom_call.1} parent=1 // pred_check
      _
    $region19: #{tpu_custom_call.1} parent=1 // pred_check_branch
      %486 = sbr.rel (0) target = $region21
    $region20: #{tpu_custom_call.1} parent=1 // pred_region
      %s488 = ssub.s32 1152, 1152
      %489 = vsyncadd [#allocation4], %s488
      %s491 = sshll.u32 [#allocation5], 4
      %s492 = int_to_ptr.vmem [resolvable:$true] %s491
      %494 = dma.vmem_to_hbm [thread:$0]  %s492, 1152, %s3, [#allocation4]
    $region21: #{tpu_custom_call.1} parent=1 // pred_fallthru
      _
    // Predicated region
    $region22: #{tpu_custom_call.1} parent=1 // pred_check
      _
    $region23: #{tpu_custom_call.1} parent=1 // pred_check_branch
      %496 = sbr.rel (0) target = $region25
    $region24: #{tpu_custom_call.1} parent=1 // pred_region
      %497 = dma.done [#allocation4], 1152
    $region25: #{tpu_custom_call.1} parent=1 // pred_fallthru
      _
    %498 = vsyncpa [#allocation3], 1
    %499 = vsyncpa [#allocation4], 1

</llo_original>
